<compile_context>
chip_gen: v7x
topology: tpu7x:2x2x1
jax: 0.10.0
libtpu: 0.0.40
codegen_flags: <defaults>
</compile_context>

<pallas_src>
import functools

import jax
import jax.numpy as jnp
from jax import lax
from jax.experimental import pallas as pl
from jax.experimental.pallas import tpu as pltpu

_LANE = 128


def _round_up(n, m):
    return ((n + m - 1) // m) * m


def _sublane_multiple(dtype):
    # f32 -> 8, bf16 -> 16, int8/fp8 -> 32 (packed sublanes).
    itemsize = max(1, jnp.dtype(dtype).itemsize)
    return max(8, 8 * (4 // itemsize))


def _vmem_capacity_bytes():
    try:
        return int(pltpu.get_tpu_info().vmem_capacity_bytes)
    except Exception:
        return 64 << 20  # v7x is the most constrained generation; be conservative


def _per_buffer_target(cap_bytes):
    # ~8 MiB/buffer on 64 MiB-VMEM chips (v7x), ~12 MiB on 128 MiB chips (v5e/v6e).
    return (8 << 20) if cap_bytes <= (64 << 20) else (12 << 20)


# --------------------------------------------------------------------------- #
# Kernels
# --------------------------------------------------------------------------- #
def _sum_seq_kernel(x_ref, o_ref):
    # x_ref: (bt, S, F) block, o_ref: (bt, F) block.
    # softmax(relu(x @ W.T), dim=-1) over the singleton score axis == 1.0, so
    # the module output is exactly the sum over the sequence axis.
    o_ref[...] = jnp.sum(x_ref[...].astype(jnp.float32), axis=1).astype(o_ref.dtype)


def _sum_seq_acc_kernel(x_ref, o_ref, acc_ref, *, seq_len, seq_block):
    # S-tiled variant: grid = (batch_blocks, seq_blocks); the output block is
    # resident across the trailing "arbitrary" seq axis and an f32 VMEM
    # accumulator carries the partial sums (init at s==0, store at s==last).
    s = pl.program_id(1)

    @pl.when(s == 0)
    def _():
        acc_ref[...] = jnp.zeros_like(acc_ref)

    x = x_ref[...].astype(jnp.float32)  # (bt, st, F)
    if seq_len % seq_block != 0:
        # Mask out-of-range rows of the ragged final sequence block.
        seq_idx = s * seq_block + lax.broadcasted_iota(jnp.int32, x.shape, 1)
        x = jnp.where(seq_idx < seq_len, x, 0.0)
    acc_ref[...] += jnp.sum(x, axis=1)

    @pl.when(s == pl.num_programs(1) - 1)
    def _():
        o_ref[...] = acc_ref[...].astype(o_ref.dtype)


# --------------------------------------------------------------------------- #
# Wrapper
# --------------------------------------------------------------------------- #
def attention_forward(x, attention_weights=None, *, per_buffer_bytes=None):
    """x: (B, S, F); attention_weights: (1, F) (mathematically a no-op because
    the softmax is over a singleton axis).  Returns (B, F) in x.dtype."""
    B, S, F = x.shape
    dtype = x.dtype
    itemsize = jnp.dtype(dtype).itemsize
    sub = _sublane_multiple(dtype)
    cap = _vmem_capacity_bytes()
    if per_buffer_bytes is None:
        per_buffer_bytes = _per_buffer_target(cap)

    # Padded (layout) bytes -- this is what actually occupies VMEM.
    lane_bytes = _round_up(F, _LANE) * itemsize              # one padded (1, F) row
    row_bytes = _round_up(S, sub) * lane_bytes               # one padded (1, S, F) slab

    bt_fit = per_buffer_bytes // row_bytes
    if bt_fit >= B:
        bt, st = B, S
        # v7x has 2 TensorCores: keep >= 2 steps on the "parallel" batch axis
        # when the batch is large enough to split on a sublane-aligned tile.
        if B >= 2 * sub:
            bt = min(bt, _round_up(pl.cdiv(B, 2), sub))
    elif bt_fit >= sub:
        bt, st = (bt_fit // sub) * sub, S
    else:
        # Even a minimal sublane-aligned batch tile busts the budget:
        # tile the sequence axis instead (accumulator path).
        bt = B if B < sub else sub
        st_rows = (per_buffer_bytes // (bt * lane_bytes) // sub) * sub
        st = min(max(st_rows, sub), S)

    single_pass = st == S
    grid_b = pl.cdiv(B, bt)

    # Explicit scoped-VMEM limit: 2x double-buffered input + output + scratch.
    in_buf = bt * _round_up(st, sub) * lane_bytes
    out_buf = _round_up(bt, sub) * lane_bytes
    acc_buf = 0 if single_pass else _round_up(bt, 8) * _round_up(F, _LANE) * 4
    need = 2 * in_buf + 2 * out_buf + acc_buf
    vmem_limit = int(min(max(need + (4 << 20), 32 << 20), cap - (4 << 20)))

    cost = pl.CostEstimate(
        flops=B * S * F,
        transcendentals=0,
        bytes_accessed=B * S * F * itemsize + B * F * itemsize,
    )

    if single_pass:
        return pl.pallas_call(
            _sum_seq_kernel,
            out_shape=jax.ShapeDtypeStruct((B, F), dtype),
            grid_spec=pltpu.PrefetchScalarGridSpec(
                num_scalar_prefetch=0,
                grid=(grid_b,),
                in_specs=[pl.BlockSpec((bt, S, F), lambda b: (b, 0, 0))],
                out_specs=pl.BlockSpec((bt, F), lambda b: (b, 0)),
            ),
            compiler_params=pltpu.CompilerParams(
                dimension_semantics=("parallel",),
                vmem_limit_bytes=vmem_limit,
            ),
            cost_estimate=cost,
        )(x)

    grid_s = pl.cdiv(S, st)
    kernel = functools.partial(_sum_seq_acc_kernel, seq_len=S, seq_block=st)
    return pl.pallas_call(
        kernel,
        out_shape=jax.ShapeDtypeStruct((B, F), dtype),
        grid_spec=pltpu.PrefetchScalarGridSpec(
            num_scalar_prefetch=0,
            grid=(grid_b, grid_s),                   # reduction axis last
            in_specs=[pl.BlockSpec((bt, st, F), lambda b, s: (b, s, 0))],
            out_specs=pl.BlockSpec((bt, F), lambda b, s: (b, 0)),
            scratch_shapes=[pltpu.VMEM((bt, F), jnp.float32)],
        ),
        compiler_params=pltpu.CompilerParams(
            dimension_semantics=("parallel", "arbitrary"),
            vmem_limit_bytes=vmem_limit,
        ),
        cost_estimate=cost,
    )(x)


def init_attention_weights(key, features):
    # xavier_uniform_ for a (1, features) tensor: bound = sqrt(6 / (fan_in + fan_out))
    bound = (6.0 / (1.0 + features)) ** 0.5
    return jax.random.uniform(key, (1, features), jnp.float32, -bound, bound)


if __name__ == "__main__":
    key = jax.random.PRNGKey(0)
    k_x, k_w, k_x2 = jax.random.split(key, 3)

    # --- primary module-sized example: B=2, S=8, F=32 -----------------------
    B, S, F = 2, 8, 32
    x = jax.random.normal(k_x, (B, S, F), dtype=jnp.float32)
    w = init_attention_weights(k_w, F)

    out = jax.block_until_ready(attention_forward(x, w))

    # Reference (plain JAX) of the exact PyTorch op graph.
    scores = jnp.einsum("bsf,of->bso", x, w)                     # (B, S, 1)
    ref_weights = jax.nn.softmax(jax.nn.relu(scores), axis=-1)   # identically 1
    ref = jnp.sum(ref_weights * x, axis=1)                       # (B, F)
    assert out.shape == (B, F)
    assert jnp.allclose(out, ref, atol=1e-5, rtol=1e-5)

    # --- exercise the S-tiled accumulator path (forced tiny VMEM budget) ----
    B2, S2, F2 = 2, 16, 32
    x2 = jax.random.normal(k_x2, (B2, S2, F2), dtype=jnp.float32)
    out2 = jax.block_until_ready(attention_forward(x2, per_buffer_bytes=2048))
    assert out2.shape == (B2, F2)
    assert jnp.allclose(out2, jnp.sum(x2, axis=1), atol=1e-5, rtol=1e-5)

    print("KERNEL_OK")
</pallas_src>

<mosaic_0001>
module attributes {stable_mosaic.version = 11 : i64} {
  func.func @_sum_seq_kernel(%arg0: i32, %arg1: memref<2x8x32xf32, #tpu.memory_space<vmem>>, %arg2: memref<2x32xf32, #tpu.memory_space<vmem>>) attributes {dimension_semantics = [#tpu.dimension_semantics<parallel>], iteration_bounds = array<i64: 1>, scalar_prefetch = 0 : i64, scratch_operands = 0 : i64, tpu.core_type = #tpu.core_type<tc>, window_params = [{transform_indices = @transform_0, window_bounds = array<i64: 2, 8, 32>}, {transform_indices = @transform_1, window_bounds = array<i64: 2, 32>}]} {
    %c0 = arith.constant 0 : index
    %c0_0 = arith.constant 0 : index
    %c0_1 = arith.constant 0 : index
    %0 = vector.load %arg1[%c0, %c0_0, %c0_1] : memref<2x8x32xf32, #tpu.memory_space<vmem>>, vector<2x8x32xf32>
    %cst = arith.constant dense<0.000000e+00> : vector<2x32xf32>
    %1 = vector.multi_reduction <add>, %0, %cst [1] : vector<2x8x32xf32> to vector<2x32xf32>
    %c0_2 = arith.constant 0 : index
    %c0_3 = arith.constant 0 : index
    %2 = vector.load %arg2[%c0_2, %c0_3] : memref<2x32xf32, #tpu.memory_space<vmem>>, vector<2x32xf32>
    tpu.vector_store %arg2[%c0_2, %c0_3], %1 {strides = array<i32>} : memref<2x32xf32, #tpu.memory_space<vmem>>, vector<2x32xf32>,
    return
  }
  func.func @transform_0(%arg0: i32) -> (i32, i32, i32) {
    %c0_i32 = arith.constant 0 : i32
    %c0_i32_0 = arith.constant 0 : i32
    %c0_i32_1 = arith.constant 0 : i32
    return %arg0, %c0_i32, %c0_i32_0 : i32, i32, i32
  }
  func.func @transform_1(%arg0: i32) -> (i32, i32) {
    %c0_i32 = arith.constant 0 : i32
    %c0_i32_0 = arith.constant 0 : i32
    return %arg0, %c0_i32 : i32, i32
  }
}

</mosaic_0001>

<llo_original>
// kernel: tpu_custom_call.1
$region0: #{tpu_custom_call.1}
  #allocation0 [shape = 'u32[]', space=smem, size = 0x4, offset = 0x4, fixed_abs, tag = 'smem constant byte address 0x4 - core index']
  #allocation1 [shape = 'u32[144,128]{1,0:T(1,128)}', space=vmem, size = 0x12000, scoped, tag = 'internal scratch']
  %s0 = inlined_call_operand.hbm [shape: f32[2,8,32], index: 0, kind: input, shape index: {}]
  %s1 = inlined_call_operand.hbm [shape: f32[2,32], index: 1, kind: output, shape index: {}]
  %s2 = sld [smem:[#allocation0]]
  $region18: #{tpu_custom_call.1} parent=0
    _
  %s4 = ssub.s32 1, %s2
  %s5 = scalar_select 0, %s4, %s2
  $region1: #{tpu_custom_call.1} parent=0
    #allocation2 [shape = 'u8[8192]{0}', space=vmem, size = 0x2000, scoped, tag = 'input window, operand 0, single buffered']
    #allocation3 [shape = 's32[1]{0}', space=sflag, size = 0x4, scoped, tag = 'scoped memory for tpu_custom_call.1']
    #allocation4 [shape = 's32[1]{0}', space=sflag, size = 0x4, scoped, tag = 'scoped memory for tpu_custom_call.1']
    #allocation5 [shape = 'u8[1024]{0}', space=vmem, size = 0x400, scoped, tag = 'output window, operand 0, single buffered']
    %6 = vsyncpa [#allocation3], 0
    %7 = vsyncpa [#allocation4], 0
    // Predicated region
    $region2: #{tpu_custom_call.1} parent=1 // pred_check
      _
    $region3: #{tpu_custom_call.1} parent=1 // pred_check_branch
      %9 = sbr.rel (0) target = $region5
    $region4: #{tpu_custom_call.1} parent=1 // pred_region
      %s11 = ssub.s32 256, 256
      %12 = vsyncadd [#allocation3], %s11
      %s13 = sshll.u32 [#allocation2], 4
      %s14 = int_to_ptr.vmem [resolvable:$true] %s13
      %19 = dma.hbm_to_vmem [thread:$0]  %s0, 256, %s14, [#allocation3], 128, 128, 8
    $region5: #{tpu_custom_call.1} parent=1 // pred_fallthru
      _
    // Predicated region
    $region6: #{tpu_custom_call.1} parent=1 // pred_check
      _
    $region7: #{tpu_custom_call.1} parent=1 // pred_check_branch
      %21 = sbr.rel (0) target = $region9
    $region8: #{tpu_custom_call.1} parent=1 // pred_region
      %22 = dma.done [#allocation3], 256
    $region9: #{tpu_custom_call.1} parent=1 // pred_fallthru
      _
    %v23 = vld [vmem:[#allocation2] sm:$0xff]
    %v24 = vld [vmem:[#allocation2 + $0x8] sm:$0xff]
    %vm25 = vcmask 261120
    %v26 = vsel %vm25, %v23, 0.0
    %v27 = vrot.slane %v26, 4
    %v28 = vadd.f32 %v26, %v27
    %v29 = vrot.slane %v28, 2
    %v30 = vadd.f32 %v28, %v29
    %v31 = vrot.slane %v30, 1
    %v32 = vadd.f32 %v30, %v31
    %v33 = vsel %vm25, %v24, 0.0
    %v34 = vrot.slane %v33, 4
    %v35 = vadd.f32 %v33, %v34
    %v36 = vrot.slane %v35, 2
    %v37 = vadd.f32 %v35, %v36
    %v38 = vrot.slane %v37, 1
    %v39 = vadd.f32 %v37, %v38
    %vm42 = vcmask 1041409
    %v43 = vsel %vm42, %v39, %v32
    %vm45 = vcmask 254976
    %46 = vst.msk [vmem:[#allocation5] sm:$0x3] %vm45, %v43
    // Predicated region
    $region10: #{tpu_custom_call.1} parent=1 // pred_check
      _
    $region11: #{tpu_custom_call.1} parent=1 // pred_check_branch
      %48 = sbr.rel (0) target = $region13
    $region12: #{tpu_custom_call.1} parent=1 // pred_region
      %s50 = ssub.s32 32, 32
      %51 = vsyncadd [#allocation4], %s50
      %s53 = sshll.u32 [#allocation5], 4
      %s54 = int_to_ptr.vmem [resolvable:$true] %s53
      %56 = dma.vmem_to_hbm [thread:$0]  %s54, 32, %s1, [#allocation4]
    $region13: #{tpu_custom_call.1} parent=1 // pred_fallthru
      _
    // Predicated region
    $region14: #{tpu_custom_call.1} parent=1 // pred_check
      _
    $region15: #{tpu_custom_call.1} parent=1 // pred_check_branch
      %58 = sbr.rel (0) target = $region17
    $region16: #{tpu_custom_call.1} parent=1 // pred_region
      %59 = dma.done [#allocation4], 32
    $region17: #{tpu_custom_call.1} parent=1 // pred_fallthru
      _
    %60 = vsyncpa [#allocation3], 1
    %61 = vsyncpa [#allocation4], 1

</llo_original>
